<compile_context>
chip_gen: v7x
topology: tpu7x:2x2x1
jax: 0.10.0
libtpu: 0.0.40
codegen_flags: <defaults>
</compile_context>

<pallas_src>
import functools

import jax
import jax.numpy as jnp
from jax.experimental import pallas as pl
from jax.experimental.pallas import tpu as pltpu


# ----------------------------------------------------------------------------
# Fused Pallas kernel
# ----------------------------------------------------------------------------
def _make_fused_kernel(num_sage_layers: int, M: int, N: int):
    """Builds the fused forward kernel.

    Ref layout (positional):
      adj_bd [M*N, M*N], x [M*N, Cin], kg_adj [M, M],
      (wl_i, wr_i, b_i) for each SAGE layer,
      gcn1_w, gcn1_b, gcn2_w, gcn2_b,
      out [M, Fout]
    """

    def kernel(*refs):
        adj_ref, x_ref, kg_ref = refs[0], refs[1], refs[2]
        idx = 3
        sage_layers = []
        for _ in range(num_sage_layers):
            sage_layers.append((refs[idx], refs[idx + 1], refs[idx + 2]))
            idx += 3
        g1w_ref, g1b_ref, g2w_ref, g2b_ref = (
            refs[idx], refs[idx + 1], refs[idx + 2], refs[idx + 3])
        out_ref = refs[idx + 4]

        adj = adj_ref[...]                                   # [MN, MN]
        h = x_ref[...]                                       # [MN, Cin]

        # ---- SAGEMolGCN layers (all molecules batched via block-diag adj) ---
        for li, (wl_ref, wr_ref, b_ref) in enumerate(sage_layers):
            agg = jnp.dot(adj, h, preferred_element_type=jnp.float32)
            h_new = (jnp.dot(agg, wl_ref[...],
                             preferred_element_type=jnp.float32)
                     + jnp.dot(h, wr_ref[...],
                               preferred_element_type=jnp.float32)
                     + b_ref[...])                           # bias used once/layer
            if li != num_sage_layers - 1:
                # dropout(p=0.5) is identity in eval mode.
                h_new = jnp.maximum(h_new, 0.0)
            h = h_new                                        # [MN, Fout]

        # ---- per-molecule min over nodes (rows m*N .. (m+1)*N) --------------
        embs = [jnp.min(h[m * N:(m + 1) * N, :], axis=0, keepdims=True)
                for m in range(M)]
        emb = jnp.concatenate(embs, axis=0)                  # [M, Fout]

        # ---- knowledge-graph GCN layers -------------------------------------
        kg = kg_ref[...]                                     # [M, M]
        h1 = (jnp.dot(jnp.dot(kg, emb, preferred_element_type=jnp.float32),
                      g1w_ref[...], preferred_element_type=jnp.float32)
              + g1b_ref[...])
        h1 = jnp.maximum(h1, 0.0)
        h2 = (jnp.dot(jnp.dot(kg, h1, preferred_element_type=jnp.float32),
                      g2w_ref[...], preferred_element_type=jnp.float32)
              + g2b_ref[...])
        out_ref[...] = h2                                    # single lane-dense write

    return kernel


# ----------------------------------------------------------------------------
# Plain-JAX glue
# ----------------------------------------------------------------------------
def mean_agg_matrix(edge_index, num_nodes):
    """A[i, j] = 1/deg_in(i) for each edge j->i (PyG SAGEConv mean aggr)."""
    src, dst = edge_index[0], edge_index[1]
    a = jnp.zeros((num_nodes, num_nodes), jnp.float32).at[dst, src].add(1.0)
    deg = a.sum(axis=1, keepdims=True)
    return a / jnp.maximum(deg, 1.0)


def gcn_norm_adj(edge_index, num_nodes):
    """D^{-1/2}(A + I)D^{-1/2} (PyG GCNConv with self-loops, sym norm)."""
    src, dst = edge_index[0], edge_index[1]
    a = jnp.zeros((num_nodes, num_nodes), jnp.float32).at[dst, src].add(1.0)
    a = a + jnp.eye(num_nodes, dtype=jnp.float32)
    deg = a.sum(axis=1)
    dinv = 1.0 / jnp.sqrt(jnp.maximum(deg, 1.0))
    return dinv[:, None] * a * dinv[None, :]


def block_diag_adj(mol_adj):
    """[M, N, N] per-molecule adjacency -> block-diagonal [M*N, M*N]."""
    M, N, _ = mol_adj.shape
    eye = jnp.eye(M, dtype=mol_adj.dtype)
    bd = eye[:, None, :, None] * mol_adj[:, :, None, :]       # [M, N, M, N]
    return bd.reshape(M * N, M * N)


def init_params(key, in_channels, out_channels, heads):
    """heads == num_layers of the molecule SAGE GNN (as in the PyTorch code)."""
    params = {"sage": []}
    k = iter(jax.random.split(key, 4 * heads + 4))
    for i in range(heads):
        cin = in_channels if i == 0 else out_channels
        params["sage"].append({
            "wl": 0.1 * jax.random.normal(next(k), (cin, out_channels), jnp.float32),
            "wr": 0.1 * jax.random.normal(next(k), (cin, out_channels), jnp.float32),
            "b": 0.1 * jax.random.normal(next(k), (1, out_channels), jnp.float32),
        })
    params["gcn1"] = {
        "w": 0.1 * jax.random.normal(next(k), (out_channels, 2 * out_channels), jnp.float32),
        "b": 0.1 * jax.random.normal(next(k), (1, 2 * out_channels), jnp.float32),
    }
    params["gcn2"] = {
        "w": 0.1 * jax.random.normal(next(k), (2 * out_channels, out_channels), jnp.float32),
        "b": 0.1 * jax.random.normal(next(k), (1, out_channels), jnp.float32),
    }
    return params


# ----------------------------------------------------------------------------
# Full forward pass (one fused pallas_call)
# ----------------------------------------------------------------------------
@jax.jit
def sage_kgcn_forward(params, mol_x, mol_adj, kg_adj):
    """mol_x:[M,N,Cin] mol_adj:[M,N,N] kg_adj:[M,M] -> [M, out_channels]."""
    M, N, Cin = mol_x.shape
    num_layers = len(params["sage"])
    Fout = params["sage"][-1]["wl"].shape[1]
    MN = M * N

    adj_bd = block_diag_adj(mol_adj)                          # [MN, MN]
    x_flat = mol_x.reshape(MN, Cin)                           # [MN, Cin]

    inputs = [adj_bd, x_flat, kg_adj]
    for layer in params["sage"]:
        inputs += [layer["wl"], layer["wr"], layer["b"]]
    inputs += [params["gcn1"]["w"], params["gcn1"]["b"],
               params["gcn2"]["w"], params["gcn2"]["b"]]

    # Advisory cost estimate: this custom call is tiny / launch-bound.
    flops = 0
    cin = Cin
    for _ in range(num_layers):
        flops += 2 * MN * MN * cin            # block-diag A @ h
        flops += 2 * 2 * MN * cin * Fout      # h @ W_l, h @ W_r
        flops += 2 * MN * Fout                # adds
        cin = Fout
    flops += 2 * M * M * Fout + 2 * M * Fout * (2 * Fout)         # GCN1
    flops += 2 * M * M * (2 * Fout) + 2 * M * (2 * Fout) * Fout   # GCN2
    bytes_accessed = sum(int(a.size) for a in inputs) * 4 + M * Fout * 4

    return pl.pallas_call(
        _make_fused_kernel(num_layers, M, N),
        out_shape=jax.ShapeDtypeStruct((M, Fout), jnp.float32),
        cost_estimate=pl.CostEstimate(
            flops=flops, transcendentals=0, bytes_accessed=bytes_accessed),
        compiler_params=pltpu.CompilerParams(
            vmem_limit_bytes=16 * 1024 * 1024),
    )(*inputs)


def reference_forward(params, mol_x, mol_adj, kg_adj):
    """Pure jnp reference for correctness checking."""
    num_layers = len(params["sage"])
    h = mol_x
    for i, layer in enumerate(params["sage"]):
        h = (jnp.einsum("mij,mjf->mif", mol_adj, h) @ layer["wl"]
             + h @ layer["wr"] + layer["b"])
        if i != num_layers - 1:
            h = jnp.maximum(h, 0.0)
    emb = jnp.min(h, axis=1)
    h1 = jnp.maximum(kg_adj @ emb @ params["gcn1"]["w"] + params["gcn1"]["b"], 0.0)
    return kg_adj @ h1 @ params["gcn2"]["w"] + params["gcn2"]["b"]


# ----------------------------------------------------------------------------
if __name__ == "__main__":
    in_channels, out_channels, heads = 4, 8, 2     # heads -> num SAGE layers
    M = 4                                          # number of molecules (KG nodes)
    N = 8                                          # nodes per molecule

    key = jax.random.PRNGKey(0)
    k_param, k_feat = jax.random.split(key)
    params = init_params(k_param, in_channels, out_channels, heads)

    # Deterministic molecule graphs: bidirectional ring on N nodes.
    nodes = jnp.arange(N)
    mol_edge_index = jnp.stack([
        jnp.concatenate([nodes, nodes]),
        jnp.concatenate([(nodes + 1) % N, (nodes - 1) % N]),
    ])                                             # [2, 2N], same for every mol
    mol_adj = jnp.stack([mean_agg_matrix(mol_edge_index, N)] * M)   # [M, N, N]

    # Deterministic molecule node features.
    mol_x = jax.random.normal(k_feat, (M, N, in_channels), jnp.float32)

    # Knowledge-graph edges: bidirectional ring over the M molecules.
    kg_nodes = jnp.arange(M)
    kg_edge_index = jnp.stack([
        jnp.concatenate([kg_nodes, kg_nodes]),
        jnp.concatenate([(kg_nodes + 1) % M, (kg_nodes - 1) % M]),
    ])
    kg_adj = gcn_norm_adj(kg_edge_index, M)        # [M, M]

    out = sage_kgcn_forward(params, mol_x, mol_adj, kg_adj)
    out = jax.block_until_ready(out)

    ref = reference_forward(params, mol_x, mol_adj, kg_adj)
    assert out.shape == (M, out_channels)
    assert jnp.allclose(out, ref, atol=1e-5, rtol=1e-5)

    print("KERNEL_OK")
</pallas_src>

<mosaic_0001>
module attributes {stable_mosaic.version = 11 : i64} {
  func.func @kernel(%arg0: memref<32x32xf32, #tpu.memory_space<vmem>>, %arg1: memref<32x4xf32, #tpu.memory_space<vmem>>, %arg2: memref<4x4xf32, #tpu.memory_space<vmem>>, %arg3: memref<4x8xf32, #tpu.memory_space<vmem>>, %arg4: memref<4x8xf32, #tpu.memory_space<vmem>>, %arg5: memref<1x8xf32, #tpu.memory_space<vmem>>, %arg6: memref<8x8xf32, #tpu.memory_space<vmem>>, %arg7: memref<8x8xf32, #tpu.memory_space<vmem>>, %arg8: memref<1x8xf32, #tpu.memory_space<vmem>>, %arg9: memref<8x16xf32, #tpu.memory_space<vmem>>, %arg10: memref<1x16xf32, #tpu.memory_space<vmem>>, %arg11: memref<16x8xf32, #tpu.memory_space<vmem>>, %arg12: memref<1x8xf32, #tpu.memory_space<vmem>>, %arg13: memref<4x8xf32, #tpu.memory_space<vmem>>) attributes {dimension_semantics = [], scalar_prefetch = 0 : i64, scratch_operands = 0 : i64, tpu.core_type = #tpu.core_type<tc>} {
    %c0 = arith.constant 0 : index
    %c0_0 = arith.constant 0 : index
    %0 = vector.load %arg0[%c0, %c0_0] : memref<32x32xf32, #tpu.memory_space<vmem>>, vector<32x32xf32>
    %c0_1 = arith.constant 0 : index
    %c0_2 = arith.constant 0 : index
    %1 = vector.load %arg1[%c0_1, %c0_2] : memref<32x4xf32, #tpu.memory_space<vmem>>, vector<32x4xf32>
    %cst = arith.constant dense<0.000000e+00> : vector<32x4xf32>
    %2 = tpu.matmul %0, %1, %cst {dimension_numbers = #tpu.dot_dimension_numbers<[1], [0], [0], [1], [0, 0, 1, 1], [], []>} : vector<32x32xf32>, vector<32x4xf32>, vector<32x4xf32> -> vector<32x4xf32>
    %c0_3 = arith.constant 0 : index
    %c0_4 = arith.constant 0 : index
    %3 = vector.load %arg3[%c0_3, %c0_4] : memref<4x8xf32, #tpu.memory_space<vmem>>, vector<4x8xf32>
    %cst_5 = arith.constant dense<0.000000e+00> : vector<32x8xf32>
    %4 = tpu.matmul %2, %3, %cst_5 {dimension_numbers = #tpu.dot_dimension_numbers<[1], [0], [0], [1], [0, 0, 1, 1], [], []>} : vector<32x4xf32>, vector<4x8xf32>, vector<32x8xf32> -> vector<32x8xf32>
    %c0_6 = arith.constant 0 : index
    %c0_7 = arith.constant 0 : index
    %5 = vector.load %arg4[%c0_6, %c0_7] : memref<4x8xf32, #tpu.memory_space<vmem>>, vector<4x8xf32>
    %cst_8 = arith.constant dense<0.000000e+00> : vector<32x8xf32>
    %6 = tpu.matmul %1, %5, %cst_8 {dimension_numbers = #tpu.dot_dimension_numbers<[1], [0], [0], [1], [0, 0, 1, 1], [], []>} : vector<32x4xf32>, vector<4x8xf32>, vector<32x8xf32> -> vector<32x8xf32>
    %7 = arith.addf %4, %6 : vector<32x8xf32>
    %c0_9 = arith.constant 0 : index
    %c0_10 = arith.constant 0 : index
    %8 = vector.load %arg5[%c0_9, %c0_10] : memref<1x8xf32, #tpu.memory_space<vmem>>, vector<1x8xf32>
    %9 = vector.broadcast %8 : vector<1x8xf32> to vector<32x8xf32>
    %10 = arith.addf %7, %9 : vector<32x8xf32>
    %cst_11 = arith.constant 0.000000e+00 : f32
    %11 = vector.broadcast %cst_11 : f32 to vector<32x8xf32>
    %12 = arith.maximumf %10, %11 : vector<32x8xf32>
    %cst_12 = arith.constant dense<0.000000e+00> : vector<32x8xf32>
    %13 = tpu.matmul %0, %12, %cst_12 {dimension_numbers = #tpu.dot_dimension_numbers<[1], [0], [0], [1], [0, 0, 1, 1], [], []>} : vector<32x32xf32>, vector<32x8xf32>, vector<32x8xf32> -> vector<32x8xf32>
    %c0_13 = arith.constant 0 : index
    %c0_14 = arith.constant 0 : index
    %14 = vector.load %arg6[%c0_13, %c0_14] : memref<8x8xf32, #tpu.memory_space<vmem>>, vector<8x8xf32>
    %cst_15 = arith.constant dense<0.000000e+00> : vector<32x8xf32>
    %15 = tpu.matmul %13, %14, %cst_15 {dimension_numbers = #tpu.dot_dimension_numbers<[1], [0], [0], [1], [0, 0, 1, 1], [], []>} : vector<32x8xf32>, vector<8x8xf32>, vector<32x8xf32> -> vector<32x8xf32>
    %c0_16 = arith.constant 0 : index
    %c0_17 = arith.constant 0 : index
    %16 = vector.load %arg7[%c0_16, %c0_17] : memref<8x8xf32, #tpu.memory_space<vmem>>, vector<8x8xf32>
    %cst_18 = arith.constant dense<0.000000e+00> : vector<32x8xf32>
    %17 = tpu.matmul %12, %16, %cst_18 {dimension_numbers = #tpu.dot_dimension_numbers<[1], [0], [0], [1], [0, 0, 1, 1], [], []>} : vector<32x8xf32>, vector<8x8xf32>, vector<32x8xf32> -> vector<32x8xf32>
    %18 = arith.addf %15, %17 : vector<32x8xf32>
    %c0_19 = arith.constant 0 : index
    %c0_20 = arith.constant 0 : index
    %19 = vector.load %arg8[%c0_19, %c0_20] : memref<1x8xf32, #tpu.memory_space<vmem>>, vector<1x8xf32>
    %20 = vector.broadcast %19 : vector<1x8xf32> to vector<32x8xf32>
    %21 = arith.addf %18, %20 : vector<32x8xf32>
    %22 = vector.extract_strided_slice %21 {offsets = [0, 0], sizes = [8, 8], strides = [1, 1]} : vector<32x8xf32> to vector<8x8xf32>
    %cst_21 = arith.constant dense<0x7F800000> : vector<8xf32>
    %23 = vector.multi_reduction <minimumf>, %22, %cst_21 [0] : vector<8x8xf32> to vector<8xf32>
    %24 = vector.shape_cast %23 : vector<8xf32> to vector<1x8xf32>
    %25 = vector.extract_strided_slice %21 {offsets = [8, 0], sizes = [8, 8], strides = [1, 1]} : vector<32x8xf32> to vector<8x8xf32>
    %cst_22 = arith.constant dense<0x7F800000> : vector<8xf32>
    %26 = vector.multi_reduction <minimumf>, %25, %cst_22 [0] : vector<8x8xf32> to vector<8xf32>
    %27 = vector.shape_cast %26 : vector<8xf32> to vector<1x8xf32>
    %28 = vector.extract_strided_slice %21 {offsets = [16, 0], sizes = [8, 8], strides = [1, 1]} : vector<32x8xf32> to vector<8x8xf32>
    %cst_23 = arith.constant dense<0x7F800000> : vector<8xf32>
    %29 = vector.multi_reduction <minimumf>, %28, %cst_23 [0] : vector<8x8xf32> to vector<8xf32>
    %30 = vector.shape_cast %29 : vector<8xf32> to vector<1x8xf32>
    %31 = vector.extract_strided_slice %21 {offsets = [24, 0], sizes = [8, 8], strides = [1, 1]} : vector<32x8xf32> to vector<8x8xf32>
    %cst_24 = arith.constant dense<0x7F800000> : vector<8xf32>
    %32 = vector.multi_reduction <minimumf>, %31, %cst_24 [0] : vector<8x8xf32> to vector<8xf32>
    %33 = vector.shape_cast %32 : vector<8xf32> to vector<1x8xf32>
    %34 = tpu.concatenate %24, %27, %30, %33 in 0 : vector<1x8xf32>, vector<1x8xf32>, vector<1x8xf32>, vector<1x8xf32> -> vector<4x8xf32>
    %c0_25 = arith.constant 0 : index
    %c0_26 = arith.constant 0 : index
    %35 = vector.load %arg2[%c0_25, %c0_26] : memref<4x4xf32, #tpu.memory_space<vmem>>, vector<4x4xf32>
    %cst_27 = arith.constant dense<0.000000e+00> : vector<4x8xf32>
    %36 = tpu.matmul %35, %34, %cst_27 {dimension_numbers = #tpu.dot_dimension_numbers<[1], [0], [0], [1], [0, 0, 1, 1], [], []>} : vector<4x4xf32>, vector<4x8xf32>, vector<4x8xf32> -> vector<4x8xf32>
    %c0_28 = arith.constant 0 : index
    %c0_29 = arith.constant 0 : index
    %37 = vector.load %arg9[%c0_28, %c0_29] : memref<8x16xf32, #tpu.memory_space<vmem>>, vector<8x16xf32>
    %cst_30 = arith.constant dense<0.000000e+00> : vector<4x16xf32>
    %38 = tpu.matmul %36, %37, %cst_30 {dimension_numbers = #tpu.dot_dimension_numbers<[1], [0], [0], [1], [0, 0, 1, 1], [], []>} : vector<4x8xf32>, vector<8x16xf32>, vector<4x16xf32> -> vector<4x16xf32>
    %c0_31 = arith.constant 0 : index
    %c0_32 = arith.constant 0 : index
    %39 = vector.load %arg10[%c0_31, %c0_32] : memref<1x16xf32, #tpu.memory_space<vmem>>, vector<1x16xf32>
    %40 = vector.broadcast %39 : vector<1x16xf32> to vector<4x16xf32>
    %41 = arith.addf %38, %40 : vector<4x16xf32>
    %cst_33 = arith.constant 0.000000e+00 : f32
    %42 = vector.broadcast %cst_33 : f32 to vector<4x16xf32>
    %43 = arith.maximumf %41, %42 : vector<4x16xf32>
    %cst_34 = arith.constant dense<0.000000e+00> : vector<4x16xf32>
    %44 = tpu.matmul %35, %43, %cst_34 {dimension_numbers = #tpu.dot_dimension_numbers<[1], [0], [0], [1], [0, 0, 1, 1], [], []>} : vector<4x4xf32>, vector<4x16xf32>, vector<4x16xf32> -> vector<4x16xf32>
    %c0_35 = arith.constant 0 : index
    %c0_36 = arith.constant 0 : index
    %45 = vector.load %arg11[%c0_35, %c0_36] : memref<16x8xf32, #tpu.memory_space<vmem>>, vector<16x8xf32>
    %cst_37 = arith.constant dense<0.000000e+00> : vector<4x8xf32>
    %46 = tpu.matmul %44, %45, %cst_37 {dimension_numbers = #tpu.dot_dimension_numbers<[1], [0], [0], [1], [0, 0, 1, 1], [], []>} : vector<4x16xf32>, vector<16x8xf32>, vector<4x8xf32> -> vector<4x8xf32>
    %c0_38 = arith.constant 0 : index
    %c0_39 = arith.constant 0 : index
    %47 = vector.load %arg12[%c0_38, %c0_39] : memref<1x8xf32, #tpu.memory_space<vmem>>, vector<1x8xf32>
    %48 = vector.broadcast %47 : vector<1x8xf32> to vector<4x8xf32>
    %49 = arith.addf %46, %48 : vector<4x8xf32>
    %c0_40 = arith.constant 0 : index
    %c0_41 = arith.constant 0 : index
    %50 = vector.load %arg13[%c0_40, %c0_41] : memref<4x8xf32, #tpu.memory_space<vmem>>, vector<4x8xf32>
    tpu.vector_store %arg13[%c0_40, %c0_41], %49 {strides = array<i32>} : memref<4x8xf32, #tpu.memory_space<vmem>>, vector<4x8xf32>,
    return
  }
}

</mosaic_0001>

<llo_original>
// kernel: sage_kgcn_forward.1
$region0: #{sage_kgcn_forward.1}
  #allocation0 [shape = 'u32[]', space=smem, size = 0x4, offset = 0x4, fixed_abs, tag = 'smem constant byte address 0x4 - core index']
  #allocation1 [shape = 'u32[144,128]{1,0:T(1,128)}', space=vmem, size = 0x12000, scoped, tag = 'internal scratch']
  %s0 = inlined_call_operand.vmem [shape: f32[32,32], index: 0, kind: input, shape index: {}]
  %s1 = inlined_call_operand.vmem [shape: f32[32,4], index: 1, kind: input, shape index: {}]
  %s2 = inlined_call_operand.vmem [shape: f32[4,4], index: 2, kind: input, shape index: {}]
  %s3 = inlined_call_operand.vmem [shape: f32[4,8], index: 3, kind: input, shape index: {}]
  %s4 = inlined_call_operand.vmem [shape: f32[4,8], index: 4, kind: input, shape index: {}]
  %s5 = inlined_call_operand.vmem [shape: f32[1,8], index: 5, kind: input, shape index: {}]
  %s6 = inlined_call_operand.vmem [shape: f32[8,8], index: 6, kind: input, shape index: {}]
  %s7 = inlined_call_operand.vmem [shape: f32[8,8], index: 7, kind: input, shape index: {}]
  %s8 = inlined_call_operand.vmem [shape: f32[1,8], index: 8, kind: input, shape index: {}]
  %s9 = inlined_call_operand.vmem [shape: f32[8,16], index: 9, kind: input, shape index: {}]
  %s10 = inlined_call_operand.vmem [shape: f32[1,16], index: 10, kind: input, shape index: {}]
  %s11 = inlined_call_operand.vmem [shape: f32[16,8], index: 11, kind: input, shape index: {}]
  %s12 = inlined_call_operand.vmem [shape: f32[1,8], index: 12, kind: input, shape index: {}]
  %s13 = inlined_call_operand.hbm [shape: f32[4,8], index: 13, kind: output, shape index: {}]
  %s14 = sld [smem:[#allocation0]]
  $region62: #{sage_kgcn_forward.1} parent=0
    _
  %s16 = ssub.s32 1, %s14
  %s17 = scalar_select 0, %s16, %s14
  $region1: #{sage_kgcn_forward.1} parent=0
    #allocation2 [shape = 'u8[2048]{0}', space=vmem, size = 0x800, scoped, tag = 'output window, operand 0, single buffered']
    #allocation3 [shape = 's32[1]{0}', space=sflag, size = 0x4, scoped, tag = 'scoped memory for sage_kgcn_forward.1']
    %18 = vsyncpa [#allocation3], 0
    // Predicated region
    $region2: #{sage_kgcn_forward.1} parent=1 // pred_check
      _
    $region3: #{sage_kgcn_forward.1} parent=1 // pred_check_branch
      %20 = sbr.rel (0) target = $region5
    $region4: #{sage_kgcn_forward.1} parent=1 // pred_region
      _
    $region5: #{sage_kgcn_forward.1} parent=1 // pred_fallthru
      _
    // Predicated region
    $region6: #{sage_kgcn_forward.1} parent=1 // pred_check
      _
    $region7: #{sage_kgcn_forward.1} parent=1 // pred_check_branch
      %22 = sbr.rel (0) target = $region9
    $region8: #{sage_kgcn_forward.1} parent=1 // pred_region
      _
    $region9: #{sage_kgcn_forward.1} parent=1 // pred_fallthru
      _
    // Predicated region
    $region10: #{sage_kgcn_forward.1} parent=1 // pred_check
      _
    $region11: #{sage_kgcn_forward.1} parent=1 // pred_check_branch
      %24 = sbr.rel (0) target = $region13
    $region12: #{sage_kgcn_forward.1} parent=1 // pred_region
      _
    $region13: #{sage_kgcn_forward.1} parent=1 // pred_fallthru
      _
    // Predicated region
    $region14: #{sage_kgcn_forward.1} parent=1 // pred_check
      _
    $region15: #{sage_kgcn_forward.1} parent=1 // pred_check_branch
      %26 = sbr.rel (0) target = $region17
    $region16: #{sage_kgcn_forward.1} parent=1 // pred_region
      _
    $region17: #{sage_kgcn_forward.1} parent=1 // pred_fallthru
      _
    // Predicated region
    $region18: #{sage_kgcn_forward.1} parent=1 // pred_check
      _
    $region19: #{sage_kgcn_forward.1} parent=1 // pred_check_branch
      %28 = sbr.rel (0) target = $region21
    $region20: #{sage_kgcn_forward.1} parent=1 // pred_region
      _
    $region21: #{sage_kgcn_forward.1} parent=1 // pred_fallthru
      _
    // Predicated region
    $region22: #{sage_kgcn_forward.1} parent=1 // pred_check
      _
    $region23: #{sage_kgcn_forward.1} parent=1 // pred_check_branch
      %30 = sbr.rel (0) target = $region25
    $region24: #{sage_kgcn_forward.1} parent=1 // pred_region
      _
    $region25: #{sage_kgcn_forward.1} parent=1 // pred_fallthru
      _
    // Predicated region
    $region26: #{sage_kgcn_forward.1} parent=1 // pred_check
      _
    $region27: #{sage_kgcn_forward.1} parent=1 // pred_check_branch
      %32 = sbr.rel (0) target = $region29
    $region28: #{sage_kgcn_forward.1} parent=1 // pred_region
      _
    $region29: #{sage_kgcn_forward.1} parent=1 // pred_fallthru
      _
    // Predicated region
    $region30: #{sage_kgcn_forward.1} parent=1 // pred_check
      _
    $region31: #{sage_kgcn_forward.1} parent=1 // pred_check_branch
      %34 = sbr.rel (0) target = $region33
    $region32: #{sage_kgcn_forward.1} parent=1 // pred_region
      _
    $region33: #{sage_kgcn_forward.1} parent=1 // pred_fallthru
      _
    // Predicated region
    $region34: #{sage_kgcn_forward.1} parent=1 // pred_check
      _
    $region35: #{sage_kgcn_forward.1} parent=1 // pred_check_branch
      %36 = sbr.rel (0) target = $region37
    $region36: #{sage_kgcn_forward.1} parent=1 // pred_region
      _
    $region37: #{sage_kgcn_forward.1} parent=1 // pred_fallthru
      _
    // Predicated region
    $region38: #{sage_kgcn_forward.1} parent=1 // pred_check
      _
    $region39: #{sage_kgcn_forward.1} parent=1 // pred_check_branch
      %38 = sbr.rel (0) target = $region41
    $region40: #{sage_kgcn_forward.1} parent=1 // pred_region
      _
    $region41: #{sage_kgcn_forward.1} parent=1 // pred_fallthru
      _
    // Predicated region
    $region42: #{sage_kgcn_forward.1} parent=1 // pred_check
      _
    $region43: #{sage_kgcn_forward.1} parent=1 // pred_check_branch
      %40 = sbr.rel (0) target = $region45
    $region44: #{sage_kgcn_forward.1} parent=1 // pred_region
      _
    $region45: #{sage_kgcn_forward.1} parent=1 // pred_fallthru
      _
    // Predicated region
    $region46: #{sage_kgcn_forward.1} parent=1 // pred_check
      _
    $region47: #{sage_kgcn_forward.1} parent=1 // pred_check_branch
      %42 = sbr.rel (0) target = $region49
    $region48: #{sage_kgcn_forward.1} parent=1 // pred_region
      _
    $region49: #{sage_kgcn_forward.1} parent=1 // pred_fallthru
      _
    // Predicated region
    $region50: #{sage_kgcn_forward.1} parent=1 // pred_check
      _
    $region51: #{sage_kgcn_forward.1} parent=1 // pred_check_branch
      %44 = sbr.rel (0) target = $region53
    $region52: #{sage_kgcn_forward.1} parent=1 // pred_region
      _
    $region53: #{sage_kgcn_forward.1} parent=1 // pred_fallthru
      _
    %v45 = vld [vmem:[%s0] sm:$0xff]
    %v46 = vld [vmem:[%s0 + $0x8] sm:$0xff]
    %v47 = vld [vmem:[%s0 + $0x10] sm:$0xff]
    %v48 = vld [vmem:[%s0 + $0x18] sm:$0xff]
    %v49 = vld [vmem:[%s1] sm:$0xff]
    %v50 = vld [vmem:[%s1 + $0x8] sm:$0xff]
    %v51 = vld [vmem:[%s1 + $0x10] sm:$0xff]
    %v52 = vld [vmem:[%s1 + $0x18] sm:$0xff]
    %vm53 = vcmask 261120
    %v55 = vsel %vm53, %v45, 0
    %v58 = vsel %vm53, %v46, 0
    %v61 = vsel %vm53, %v47, 0
    %v64 = vsel %vm53, %v48, 0
    %66 = vmatprep.subr.mxu0 0.0
    %67 = vmatpush1.msra.mxu0 %v49
    %68 = vmatprep.subr.mxu0 0.0
    %69 = vmatpush1.msra.mxu0 %v50
    %70 = vmatprep.subr.mxu0 0.0
    %71 = vmatpush1.msra.mxu0 %v51
    %72 = vmatprep.subr.mxu0 0.0
    %73 = vmatpush1.msra.mxu0 %v52
    %74 = vmatprep.subr.mxu0 0.0
    %75 = vmatpush1.msra.mxu0 0.0
    %76 = vmatprep.subr.mxu0 0.0
    %77 = vmatpush1.msra.mxu0 0.0
    %78 = vmatprep.subr.mxu0 0.0
    %79 = vmatpush1.msra.mxu0 0.0
    %80 = vmatprep.subr.mxu0 0.0
    %81 = vmatpush1.msra.mxu0 0.0
    %82 = vmatprep.subr.mxu0 0.0
    %83 = vmatpush1.msra.mxu0 0.0
    %84 = vmatprep.subr.mxu0 0.0
    %85 = vmatpush1.msra.mxu0 0.0
    %86 = vmatprep.subr.mxu0 0.0
    %87 = vmatpush1.msra.mxu0 0.0
    %88 = vmatprep.subr.mxu0 0.0
    %89 = vmatpush1.msra.mxu0 0.0
    %90 = vmatprep.subr.mxu0 0.0
    %91 = vmatpush1.msra.mxu0 0.0
    %92 = vmatprep.subr.mxu0 0.0
    %93 = vmatpush1.msra.mxu0 0.0
    %94 = vmatprep.subr.mxu0 0.0
    %95 = vmatpush1.msra.mxu0 0.0
    %96 = vmatprep.subr.mxu0 0.0
    %97 = vmatpush1.msra.mxu0 0.0
    %98 = vmatprep.subr.mxu0 0.0
    %99 = vmatpush1.msra.mxu0 0.0
    %100 = vmatprep.subr.mxu0 0.0
    %101 = vmatpush1.msra.mxu0 0.0
    %102 = vmatprep.subr.mxu0 0.0
    %103 = vmatpush1.msra.mxu0 0.0
    %104 = vmatprep.subr.mxu0 0.0
    %105 = vmatpush1.msra.mxu0 0.0
    %106 = vmatprep.subr.mxu0 0.0
    %107 = vmatpush1.msra.mxu0 0.0
    %108 = vmatprep.subr.mxu0 0.0
    %109 = vmatpush1.msra.mxu0 0.0
    %110 = vmatprep.subr.mxu0 0.0
    %111 = vmatpush1.msra.mxu0 0.0
    %112 = vmatprep.subr.mxu0 0.0
    %113 = vmatpush1.msra.mxu0 0.0
    %114 = vmatprep.subr.mxu0 0.0
    %115 = vmatpush1.msra.mxu0 0.0
    %116 = vmatprep.subr.mxu0 0.0
    %117 = vmatpush1.msra.mxu0 0.0
    %118 = vmatprep.subr.mxu0 0.0
    %119 = vmatpush1.msra.mxu0 0.0
    %120 = vmatprep.subr.mxu0 0.0
    %121 = vmatpush1.msra.mxu0 0.0
    %122 = vmatprep.subr.mxu0 0.0
    %123 = vmatpush1.msra.mxu0 0.0
    %124 = vmatprep.subr.mxu0 0.0
    %125 = vmatpush1.msra.mxu0 0.0
    %126 = vmatprep.subr.mxu0 0.0
    %127 = vmatpush1.msra.mxu0 0.0
    %128 = vmatprep.subr.mxu0 0.0
    %129 = vmatpush1.msra.mxu0 0.0
    %130 = vmatprep.mubr.f32.mxu0 0.0
    %131 = vmatmul.mubr.f32.gmra.mrb[0].mxu0 %v55
    %v132 = vpop.f32.mrb[0].mxu0
    %v133 = vadd.f32 0.0, %v132
    %v134 = vpop.f32.mrb[0].mxu0
    %135 = vmatprep.mubr.f32.mxu0 0.0
    %136 = vmatmul.mubr.f32.gmra.mrb[0].mxu0 %v58
    %v137 = vpop.f32.mrb[0].mxu0
    %v138 = vadd.f32 0.0, %v137
    %v139 = vpop.f32.mrb[0].mxu0
    %140 = vmatprep.mubr.f32.mxu0 0.0
    %141 = vmatmul.mubr.f32.gmra.mrb[0].mxu0 %v61
    %v142 = vpop.f32.mrb[0].mxu0
    %v143 = vadd.f32 0.0, %v142
    %v144 = vpop.f32.mrb[0].mxu0
    %145 = vmatprep.mubr.f32.mxu0 0.0
    %146 = vmatmul.mubr.f32.gmra.mrb[0].mxu0 %v64
    %v147 = vpop.f32.mrb[0].mxu0
    %v148 = vadd.f32 0.0, %v147
    %v149 = vpop.f32.mrb[0].mxu0
    %150 = vdwg.mxu0
    %v151 = vld [vmem:[%s3] sm:$0xf]
    %v152 = vld [vmem:[%s4] sm:$0xf]
    %vm153 = vcmask 31744
    %v155 = vsel %vm153, %v49, 0
    %v158 = vsel %vm153, %v50, 0
    %v161 = vsel %vm153, %v51, 0
    %v164 = vsel %vm153, %v52, 0
    %vm166 = vcmask 1043456
    %v168 = vsel %vm166, %v152, 0
    %170 = vmatprep.subr.mxu0 0.0
    %171 = vmatpush1.msra.mxu0 %v168
    %172 = vmatprep.subr.mxu0 0.0
    %173 = vmatpush1.msra.mxu0 0.0
    %174 = vmatprep.subr.mxu0 0.0
    %175 = vmatpush1.msra.mxu0 0.0
    %176 = vmatprep.subr.mxu0 0.0
    %177 = vmatpush1.msra.mxu0 0.0
    %178 = vmatprep.subr.mxu0 0.0
    %179 = vmatpush1.msra.mxu0 0.0
    %180 = vmatprep.subr.mxu0 0.0
    %181 = vmatpush1.msra.mxu0 0.0
    %182 = vmatprep.subr.mxu0 0.0
    %183 = vmatpush1.msra.mxu0 0.0
    %184 = vmatprep.subr.mxu0 0.0
    %185 = vmatpush1.msra.mxu0 0.0
    %186 = vmatprep.subr.mxu0 0.0
    %187 = vmatpush1.msra.mxu0 0.0
    %188 = vmatprep.subr.mxu0 0.0
    %189 = vmatpush1.msra.mxu0 0.0
    %190 = vmatprep.subr.mxu0 0.0
    %191 = vmatpush1.msra.mxu0 0.0
    %192 = vmatprep.subr.mxu0 0.0
    %193 = vmatpush1.msra.mxu0 0.0
    %194 = vmatprep.subr.mxu0 0.0
    %195 = vmatpush1.msra.mxu0 0.0
    %196 = vmatprep.subr.mxu0 0.0
    %197 = vmatpush1.msra.mxu0 0.0
    %198 = vmatprep.subr.mxu0 0.0
    %199 = vmatpush1.msra.mxu0 0.0
    %200 = vmatprep.subr.mxu0 0.0
    %201 = vmatpush1.msra.mxu0 0.0
    %202 = vmatprep.subr.mxu0 0.0
    %203 = vmatpush1.msra.mxu0 0.0
    %204 = vmatprep.subr.mxu0 0.0
    %205 = vmatpush1.msra.mxu0 0.0
    %206 = vmatprep.subr.mxu0 0.0
    %207 = vmatpush1.msra.mxu0 0.0
    %208 = vmatprep.subr.mxu0 0.0
    %209 = vmatpush1.msra.mxu0 0.0
    %210 = vmatprep.subr.mxu0 0.0
    %211 = vmatpush1.msra.mxu0 0.0
    %212 = vmatprep.subr.mxu0 0.0
    %213 = vmatpush1.msra.mxu0 0.0
    %214 = vmatprep.subr.mxu0 0.0
    %215 = vmatpush1.msra.mxu0 0.0
    %216 = vmatprep.subr.mxu0 0.0
    %217 = vmatpush1.msra.mxu0 0.0
    %218 = vmatprep.subr.mxu0 0.0
    %219 = vmatpush1.msra.mxu0 0.0
    %220 = vmatprep.subr.mxu0 0.0
    %221 = vmatpush1.msra.mxu0 0.0
    %222 = vmatprep.subr.mxu0 0.0
    %223 = vmatpush1.msra.mxu0 0.0
    %224 = vmatprep.subr.mxu0 0.0
    %225 = vmatpush1.msra.mxu0 0.0
    %226 = vmatprep.subr.mxu0 0.0
    %227 = vmatpush1.msra.mxu0 0.0
    %228 = vmatprep.subr.mxu0 0.0
    %229 = vmatpush1.msra.mxu0 0.0
    %230 = vmatprep.subr.mxu0 0.0
    %231 = vmatpush1.msra.mxu0 0.0
    %232 = vmatprep.subr.mxu0 0.0
    %233 = vmatpush1.msra.mxu0 0.0
    %234 = vmatprep.mubr.f32.mxu0 0.0
    %235 = vmatmul.mubr.f32.gmra.mrb[0].mxu0 %v155
    %v236 = vpop.f32.mrb[0].mxu0
    %v237 = vadd.f32 0.0, %v236
    %v238 = vpop.f32.mrb[0].mxu0
    %239 = vmatprep.mubr.f32.mxu0 0.0
    %240 = vmatmul.mubr.f32.gmra.mrb[0].mxu0 %v158
    %v241 = vpop.f32.mrb[0].mxu0
    %v242 = vadd.f32 0.0, %v241
    %v243 = vpop.f32.mrb[0].mxu0
    %244 = vmatprep.mubr.f32.mxu0 0.0
    %245 = vmatmul.mubr.f32.gmra.mrb[0].mxu0 %v161
    %v246 = vpop.f32.mrb[0].mxu0
    %v247 = vadd.f32 0.0, %v246
    %v248 = vpop.f32.mrb[0].mxu0
    %249 = vmatprep.mubr.f32.mxu0 0.0
    %250 = vmatmul.mubr.f32.gmra.mrb[0].mxu0 %v164
    %v251 = vpop.f32.mrb[0].mxu0
    %v252 = vadd.f32 0.0, %v251
    %v253 = vpop.f32.mrb[0].mxu0
    %254 = vdwg.mxu0
    %v256 = vsel %vm153, %v133, 0
    %v259 = vsel %vm153, %v138, 0
    %v262 = vsel %vm153, %v143, 0
    %v265 = vsel %vm153, %v148, 0
    %v268 = vsel %vm166, %v151, 0
    %270 = vmatprep.subr.mxu0 0.0
    %271 = vmatpush1.msra.mxu0 %v268
    %272 = vmatprep.subr.mxu0 0.0
    %273 = vmatpush1.msra.mxu0 0.0
    %274 = vmatprep.subr.mxu0 0.0
    %275 = vmatpush1.msra.mxu0 0.0
    %276 = vmatprep.subr.mxu0 0.0
    %277 = vmatpush1.msra.mxu0 0.0
    %278 = vmatprep.subr.mxu0 0.0
    %279 = vmatpush1.msra.mxu0 0.0
    %280 = vmatprep.subr.mxu0 0.0
    %281 = vmatpush1.msra.mxu0 0.0
    %282 = vmatprep.subr.mxu0 0.0
    %283 = vmatpush1.msra.mxu0 0.0
    %284 = vmatprep.subr.mxu0 0.0
    %285 = vmatpush1.msra.mxu0 0.0
    %286 = vmatprep.subr.mxu0 0.0
    %287 = vmatpush1.msra.mxu0 0.0
    %288 = vmatprep.subr.mxu0 0.0
    %289 = vmatpush1.msra.mxu0 0.0
    %290 = vmatprep.subr.mxu0 0.0
    %291 = vmatpush1.msra.mxu0 0.0
    %292 = vmatprep.subr.mxu0 0.0
    %293 = vmatpush1.msra.mxu0 0.0
    %294 = vmatprep.subr.mxu0 0.0
    %295 = vmatpush1.msra.mxu0 0.0
    %296 = vmatprep.subr.mxu0 0.0
    %297 = vmatpush1.msra.mxu0 0.0
    %298 = vmatprep.subr.mxu0 0.0
    %299 = vmatpush1.msra.mxu0 0.0
    %300 = vmatprep.subr.mxu0 0.0
    %301 = vmatpush1.msra.mxu0 0.0
    %302 = vmatprep.subr.mxu0 0.0
    %303 = vmatpush1.msra.mxu0 0.0
    %304 = vmatprep.subr.mxu0 0.0
    %305 = vmatpush1.msra.mxu0 0.0
    %306 = vmatprep.subr.mxu0 0.0
    %307 = vmatpush1.msra.mxu0 0.0
    %308 = vmatprep.subr.mxu0 0.0
    %309 = vmatpush1.msra.mxu0 0.0
    %310 = vmatprep.subr.mxu0 0.0
    %311 = vmatpush1.msra.mxu0 0.0
    %312 = vmatprep.subr.mxu0 0.0
    %313 = vmatpush1.msra.mxu0 0.0
    %314 = vmatprep.subr.mxu0 0.0
    %315 = vmatpush1.msra.mxu0 0.0
    %316 = vmatprep.subr.mxu0 0.0
    %317 = vmatpush1.msra.mxu0 0.0
    %318 = vmatprep.subr.mxu0 0.0
    %319 = vmatpush1.msra.mxu0 0.0
    %320 = vmatprep.subr.mxu0 0.0
    %321 = vmatpush1.msra.mxu0 0.0
    %322 = vmatprep.subr.mxu0 0.0
    %323 = vmatpush1.msra.mxu0 0.0
    %324 = vmatprep.subr.mxu0 0.0
    %325 = vmatpush1.msra.mxu0 0.0
    %326 = vmatprep.subr.mxu0 0.0
    %327 = vmatpush1.msra.mxu0 0.0
    %328 = vmatprep.subr.mxu0 0.0
    %329 = vmatpush1.msra.mxu0 0.0
    %330 = vmatprep.subr.mxu0 0.0
    %331 = vmatpush1.msra.mxu0 0.0
    %332 = vmatprep.subr.mxu0 0.0
    %333 = vmatpush1.msra.mxu0 0.0
    %334 = vmatprep.mubr.f32.mxu0 0.0
    %335 = vmatmul.mubr.f32.gmra.mrb[0].mxu0 %v256
    %v336 = vpop.f32.mrb[0].mxu0
    %v337 = vadd.f32 %v237, %v336
    %v338 = vpop.f32.mrb[0].mxu0
    %339 = vmatprep.mubr.f32.mxu0 0.0
    %340 = vmatmul.mubr.f32.gmra.mrb[0].mxu0 %v259
    %v341 = vpop.f32.mrb[0].mxu0
    %v342 = vadd.f32 %v242, %v341
    %v343 = vpop.f32.mrb[0].mxu0
    %344 = vmatprep.mubr.f32.mxu0 0.0
    %345 = vmatmul.mubr.f32.gmra.mrb[0].mxu0 %v262
    %v346 = vpop.f32.mrb[0].mxu0
    %v347 = vadd.f32 %v247, %v346
    %v348 = vpop.f32.mrb[0].mxu0
    %349 = vmatprep.mubr.f32.mxu0 0.0
    %350 = vmatmul.mubr.f32.gmra.mrb[0].mxu0 %v265
    %v351 = vpop.f32.mrb[0].mxu0
    %v352 = vadd.f32 %v252, %v351
    %v353 = vpop.f32.mrb[0].mxu0
    %354 = vdwg.mxu0
    %v355 = vld [vmem:[%s5] sm:$0x1]
    %v357 = vlaneseq
    %v358 = vshrl.u32 %v357, 7
    %v359 = vsub.s32 0, %v358
    %v360 = vrot.slane %v355, %v359
    %v362 = vadd.f32 %v337, %v360
    %v363 = vadd.f32 %v342, %v360
    %v364 = vadd.f32 %v347, %v360
    %v365 = vadd.f32 %v352, %v360
    %v366 = vmax.f32 %v362, 0.0
    %v367 = vmax.f32 %v363, 0.0
    %v368 = vmax.f32 %v364, 0.0
    %v369 = vmax.f32 %v365, 0.0
    %370 = vmatprep.subr.mxu0 0.0
    %371 = vmatpush1.msra.mxu0 %v366
    %372 = vmatprep.subr.mxu0 0.0
    %373 = vmatpush1.msra.mxu0 %v367
    %374 = vmatprep.subr.mxu0 0.0
    %375 = vmatpush1.msra.mxu0 %v368
    %376 = vmatprep.subr.mxu0 0.0
    %377 = vmatpush1.msra.mxu0 %v369
    %378 = vmatprep.subr.mxu0 0.0
    %379 = vmatpush1.msra.mxu0 0.0
    %380 = vmatprep.subr.mxu0 0.0
    %381 = vmatpush1.msra.mxu0 0.0
    %382 = vmatprep.subr.mxu0 0.0
    %383 = vmatpush1.msra.mxu0 0.0
    %384 = vmatprep.subr.mxu0 0.0
    %385 = vmatpush1.msra.mxu0 0.0
    %386 = vmatprep.subr.mxu0 0.0
    %387 = vmatpush1.msra.mxu0 0.0
    %388 = vmatprep.subr.mxu0 0.0
    %389 = vmatpush1.msra.mxu0 0.0
    %390 = vmatprep.subr.mxu0 0.0
    %391 = vmatpush1.msra.mxu0 0.0
    %392 = vmatprep.subr.mxu0 0.0
    %393 = vmatpush1.msra.mxu0 0.0
    %394 = vmatprep.subr.mxu0 0.0
    %395 = vmatpush1.msra.mxu0 0.0
    %396 = vmatprep.subr.mxu0 0.0
    %397 = vmatpush1.msra.mxu0 0.0
    %398 = vmatprep.subr.mxu0 0.0
    %399 = vmatpush1.msra.mxu0 0.0
    %400 = vmatprep.subr.mxu0 0.0
    %401 = vmatpush1.msra.mxu0 0.0
    %402 = vmatprep.subr.mxu0 0.0
    %403 = vmatpush1.msra.mxu0 0.0
    %404 = vmatprep.subr.mxu0 0.0
    %405 = vmatpush1.msra.mxu0 0.0
    %406 = vmatprep.subr.mxu0 0.0
    %407 = vmatpush1.msra.mxu0 0.0
    %408 = vmatprep.subr.mxu0 0.0
    %409 = vmatpush1.msra.mxu0 0.0
    %410 = vmatprep.subr.mxu0 0.0
    %411 = vmatpush1.msra.mxu0 0.0
    %412 = vmatprep.subr.mxu0 0.0
    %413 = vmatpush1.msra.mxu0 0.0
    %414 = vmatprep.subr.mxu0 0.0
    %415 = vmatpush1.msra.mxu0 0.0
    %416 = vmatprep.subr.mxu0 0.0
    %417 = vmatpush1.msra.mxu0 0.0
    %418 = vmatprep.subr.mxu0 0.0
    %419 = vmatpush1.msra.mxu0 0.0
    %420 = vmatprep.subr.mxu0 0.0
    %421 = vmatpush1.msra.mxu0 0.0
    %422 = vmatprep.subr.mxu0 0.0
    %423 = vmatpush1.msra.mxu0 0.0
    %424 = vmatprep.subr.mxu0 0.0
    %425 = vmatpush1.msra.mxu0 0.0
    %426 = vmatprep.subr.mxu0 0.0
    %427 = vmatpush1.msra.mxu0 0.0
    %428 = vmatprep.subr.mxu0 0.0
    %429 = vmatpush1.msra.mxu0 0.0
    %430 = vmatprep.subr.mxu0 0.0
    %431 = vmatpush1.msra.mxu0 0.0
    %432 = vmatprep.subr.mxu0 0.0
    %433 = vmatpush1.msra.mxu0 0.0
    %434 = vmatprep.mubr.f32.mxu0 0.0
    %435 = vmatmul.mubr.f32.gmra.mrb[0].mxu0 %v55
    %v436 = vpop.f32.mrb[0].mxu0
    %v437 = vadd.f32 0.0, %v436
    %v438 = vpop.f32.mrb[0].mxu0
    %439 = vmatprep.mubr.f32.mxu0 0.0
    %440 = vmatmul.mubr.f32.gmra.mrb[0].mxu0 %v58
    %v441 = vpop.f32.mrb[0].mxu0
    %v442 = vadd.f32 0.0, %v441
    %v443 = vpop.f32.mrb[0].mxu0
    %444 = vmatprep.mubr.f32.mxu0 0.0
    %445 = vmatmul.mubr.f32.gmra.mrb[0].mxu0 %v61
    %v446 = vpop.f32.mrb[0].mxu0
    %v447 = vadd.f32 0.0, %v446
    %v448 = vpop.f32.mrb[0].mxu0
    %449 = vmatprep.mubr.f32.mxu0 0.0
    %450 = vmatmul.mubr.f32.gmra.mrb[0].mxu0 %v64
    %v451 = vpop.f32.mrb[0].mxu0
    %v452 = vadd.f32 0.0, %v451
    %v453 = vpop.f32.mrb[0].mxu0
    %454 = vdwg.mxu0
    %v455 = vld [vmem:[%s6] sm:$0xff]
    %v456 = vld [vmem:[%s7] sm:$0xff]
    %vm457 = vcmask 64512
    %v459 = vsel %vm457, %v366, 0
    %v462 = vsel %vm457, %v367, 0
    %v465 = vsel %vm457, %v368, 0
    %v468 = vsel %vm457, %v369, 0
    %470 = vmatprep.subr.mxu0 0.0
    %471 = vmatpush1.msra.mxu0 %v456
    %472 = vmatprep.subr.mxu0 0.0
    %473 = vmatpush1.msra.mxu0 0.0
    %474 = vmatprep.subr.mxu0 0.0
    %475 = vmatpush1.msra.mxu0 0.0
    %476 = vmatprep.subr.mxu0 0.0
    %477 = vmatpush1.msra.mxu0 0.0
    %478 = vmatprep.subr.mxu0 0.0
    %479 = vmatpush1.msra.mxu0 0.0
    %480 = vmatprep.subr.mxu0 0.0
    %481 = vmatpush1.msra.mxu0 0.0
    %482 = vmatprep.subr.mxu0 0.0
    %483 = vmatpush1.msra.mxu0 0.0
    %484 = vmatprep.subr.mxu0 0.0
    %485 = vmatpush1.msra.mxu0 0.0
    %486 = vmatprep.subr.mxu0 0.0
    %487 = vmatpush1.msra.mxu0 0.0
    %488 = vmatprep.subr.mxu0 0.0
    %489 = vmatpush1.msra.mxu0 0.0
    %490 = vmatprep.subr.mxu0 0.0
    %491 = vmatpush1.msra.mxu0 0.0
    %492 = vmatprep.subr.mxu0 0.0
    %493 = vmatpush1.msra.mxu0 0.0
    %494 = vmatprep.subr.mxu0 0.0
    %495 = vmatpush1.msra.mxu0 0.0
    %496 = vmatprep.subr.mxu0 0.0
    %497 = vmatpush1.msra.mxu0 0.0
    %498 = vmatprep.subr.mxu0 0.0
    %499 = vmatpush1.msra.mxu0 0.0
    %500 = vmatprep.subr.mxu0 0.0
    %501 = vmatpush1.msra.mxu0 0.0
    %502 = vmatprep.subr.mxu0 0.0
    %503 = vmatpush1.msra.mxu0 0.0
    %504 = vmatprep.subr.mxu0 0.0
    %505 = vmatpush1.msra.mxu0 0.0
    %506 = vmatprep.subr.mxu0 0.0
    %507 = vmatpush1.msra.mxu0 0.0
    %508 = vmatprep.subr.mxu0 0.0
    %509 = vmatpush1.msra.mxu0 0.0
    %510 = vmatprep.subr.mxu0 0.0
    %511 = vmatpush1.msra.mxu0 0.0
    %512 = vmatprep.subr.mxu0 0.0
    %513 = vmatpush1.msra.mxu0 0.0
    %514 = vmatprep.subr.mxu0 0.0
    %515 = vmatpush1.msra.mxu0 0.0
    %516 = vmatprep.subr.mxu0 0.0
    %517 = vmatpush1.msra.mxu0 0.0
    %518 = vmatprep.subr.mxu0 0.0
    %519 = vmatpush1.msra.mxu0 0.0
    %520 = vmatprep.subr.mxu0 0.0
    %521 = vmatpush1.msra.mxu0 0.0
    %522 = vmatprep.subr.mxu0 0.0
    %523 = vmatpush1.msra.mxu0 0.0
    %524 = vmatprep.subr.mxu0 0.0
    %525 = vmatpush1.msra.mxu0 0.0
    %526 = vmatprep.subr.mxu0 0.0
    %527 = vmatpush1.msra.mxu0 0.0
    %528 = vmatprep.subr.mxu0 0.0
    %529 = vmatpush1.msra.mxu0 0.0
    %530 = vmatprep.subr.mxu0 0.0
    %531 = vmatpush1.msra.mxu0 0.0
    %532 = vmatprep.subr.mxu0 0.0
    %533 = vmatpush1.msra.mxu0 0.0
    %534 = vmatprep.mubr.f32.mxu0 0.0
    %535 = vmatmul.mubr.f32.gmra.mrb[0].mxu0 %v459
    %v536 = vpop.f32.mrb[0].mxu0
    %v537 = vadd.f32 0.0, %v536
    %v538 = vpop.f32.mrb[0].mxu0
    %539 = vmatprep.mubr.f32.mxu0 0.0
    %540 = vmatmul.mubr.f32.gmra.mrb[0].mxu0 %v462
    %v541 = vpop.f32.mrb[0].mxu0
    %v542 = vadd.f32 0.0, %v541
    %v543 = vpop.f32.mrb[0].mxu0
    %544 = vmatprep.mubr.f32.mxu0 0.0
    %545 = vmatmul.mubr.f32.gmra.mrb[0].mxu0 %v465
    %v546 = vpop.f32.mrb[0].mxu0
    %v547 = vadd.f32 0.0, %v546
    %v548 = vpop.f32.mrb[0].mxu0
    %549 = vmatprep.mubr.f32.mxu0 0.0
    %550 = vmatmul.mubr.f32.gmra.mrb[0].mxu0 %v468
    %v551 = vpop.f32.mrb[0].mxu0
    %v552 = vadd.f32 0.0, %v551
    %v553 = vpop.f32.mrb[0].mxu0
    %554 = vdwg.mxu0
    %v556 = vsel %vm457, %v437, 0
    %v559 = vsel %vm457, %v442, 0
    %v562 = vsel %vm457, %v447, 0
    %v565 = vsel %vm457, %v452, 0
    %567 = vmatprep.subr.mxu0 0.0
    %568 = vmatpush1.msra.mxu0 %v455
    %569 = vmatprep.subr.mxu0 0.0
    %570 = vmatpush1.msra.mxu0 0.0
    %571 = vmatprep.subr.mxu0 0.0
    %572 = vmatpush1.msra.mxu0 0.0
    %573 = vmatprep.subr.mxu0 0.0
    %574 = vmatpush1.msra.mxu0 0.0
    %575 = vmatprep.subr.mxu0 0.0
    %576 = vmatpush1.msra.mxu0 0.0
    %577 = vmatprep.subr.mxu0 0.0
    %578 = vmatpush1.msra.mxu0 0.0
    %579 = vmatprep.subr.mxu0 0.0
    %580 = vmatpush1.msra.mxu0 0.0
    %581 = vmatprep.subr.mxu0 0.0
    %582 = vmatpush1.msra.mxu0 0.0
    %583 = vmatprep.subr.mxu0 0.0
    %584 = vmatpush1.msra.mxu0 0.0
    %585 = vmatprep.subr.mxu0 0.0
    %586 = vmatpush1.msra.mxu0 0.0
    %587 = vmatprep.subr.mxu0 0.0
    %588 = vmatpush1.msra.mxu0 0.0
    %589 = vmatprep.subr.mxu0 0.0
    %590 = vmatpush1.msra.mxu0 0.0
    %591 = vmatprep.subr.mxu0 0.0
    %592 = vmatpush1.msra.mxu0 0.0
    %593 = vmatprep.subr.mxu0 0.0
    %594 = vmatpush1.msra.mxu0 0.0
    %595 = vmatprep.subr.mxu0 0.0
    %596 = vmatpush1.msra.mxu0 0.0
    %597 = vmatprep.subr.mxu0 0.0
    %598 = vmatpush1.msra.mxu0 0.0
    %599 = vmatprep.subr.mxu0 0.0
    %600 = vmatpush1.msra.mxu0 0.0
    %601 = vmatprep.subr.mxu0 0.0
    %602 = vmatpush1.msra.mxu0 0.0
    %603 = vmatprep.subr.mxu0 0.0
    %604 = vmatpush1.msra.mxu0 0.0
    %605 = vmatprep.subr.mxu0 0.0
    %606 = vmatpush1.msra.mxu0 0.0
    %607 = vmatprep.subr.mxu0 0.0
    %608 = vmatpush1.msra.mxu0 0.0
    %609 = vmatprep.subr.mxu0 0.0
    %610 = vmatpush1.msra.mxu0 0.0
    %611 = vmatprep.subr.mxu0 0.0
    %612 = vmatpush1.msra.mxu0 0.0
    %613 = vmatprep.subr.mxu0 0.0
    %614 = vmatpush1.msra.mxu0 0.0
    %615 = vmatprep.subr.mxu0 0.0
    %616 = vmatpush1.msra.mxu0 0.0
    %617 = vmatprep.subr.mxu0 0.0
    %618 = vmatpush1.msra.mxu0 0.0
    %619 = vmatprep.subr.mxu0 0.0
    %620 = vmatpush1.msra.mxu0 0.0
    %621 = vmatprep.subr.mxu0 0.0
    %622 = vmatpush1.msra.mxu0 0.0
    %623 = vmatprep.subr.mxu0 0.0
    %624 = vmatpush1.msra.mxu0 0.0
    %625 = vmatprep.subr.mxu0 0.0
    %626 = vmatpush1.msra.mxu0 0.0
    %627 = vmatprep.subr.mxu0 0.0
    %628 = vmatpush1.msra.mxu0 0.0
    %629 = vmatprep.subr.mxu0 0.0
    %630 = vmatpush1.msra.mxu0 0.0
    %631 = vmatprep.mubr.f32.mxu0 0.0
    %632 = vmatmul.mubr.f32.gmra.mrb[0].mxu0 %v556
    %v633 = vpop.f32.mrb[0].mxu0
    %v634 = vadd.f32 %v537, %v633
    %v635 = vpop.f32.mrb[0].mxu0
    %636 = vmatprep.mubr.f32.mxu0 0.0
    %637 = vmatmul.mubr.f32.gmra.mrb[0].mxu0 %v559
    %v638 = vpop.f32.mrb[0].mxu0
    %v639 = vadd.f32 %v542, %v638
    %v640 = vpop.f32.mrb[0].mxu0
    %641 = vmatprep.mubr.f32.mxu0 0.0
    %642 = vmatmul.mubr.f32.gmra.mrb[0].mxu0 %v562
    %v643 = vpop.f32.mrb[0].mxu0
    %v644 = vadd.f32 %v547, %v643
    %v645 = vpop.f32.mrb[0].mxu0
    %646 = vmatprep.mubr.f32.mxu0 0.0
    %647 = vmatmul.mubr.f32.gmra.mrb[0].mxu0 %v565
    %v648 = vpop.f32.mrb[0].mxu0
    %v649 = vadd.f32 %v552, %v648
    %v650 = vpop.f32.mrb[0].mxu0
    %651 = vdwg.mxu0
    %v652 = vld [vmem:[%s8] sm:$0x1]
    %v654 = vlaneseq
    %v655 = vshrl.u32 %v654, 7
    %v656 = vsub.s32 0, %v655
    %v657 = vrot.slane %v652, %v656
    %v659 = vadd.f32 %v634, %v657
    %v660 = vadd.f32 %v639, %v657
    %v661 = vadd.f32 %v644, %v657
    %v662 = vadd.f32 %v649, %v657
    %v663 = vsel %vm457, %v659, inf
    %v664 = vrot.slane %v663, 4
    %v665 = vmin.f32 %v663, %v664
    %v666 = vrot.slane %v665, 2
    %v667 = vmin.f32 %v665, %v666
    %v668 = vrot.slane %v667, 1
    %v669 = vmin.f32 %v667, %v668
    %v670 = vsel %vm457, %v660, inf
    %v671 = vrot.slane %v670, 4
    %v672 = vmin.f32 %v670, %v671
    %v673 = vrot.slane %v672, 2
    %v674 = vmin.f32 %v672, %v673
    %v675 = vrot.slane %v674, 1
    %v676 = vmin.f32 %v674, %v675
    %v677 = vsel %vm457, %v661, inf
    %v678 = vrot.slane %v677, 4
    %v679 = vmin.f32 %v677, %v678
    %v680 = vrot.slane %v679, 2
    %v681 = vmin.f32 %v679, %v680
    %v682 = vrot.slane %v681, 1
    %v683 = vmin.f32 %v681, %v682
    %v684 = vsel %vm457, %v662, inf
    %v685 = vrot.slane %v684, 4
    %v686 = vmin.f32 %v684, %v685
    %v687 = vrot.slane %v686, 2
    %v688 = vmin.f32 %v686, %v687
    %v689 = vrot.slane %v688, 1
    %v690 = vmin.f32 %v688, %v689
    %vm691 = vcmask 1040384
    %v692 = vsel %vm691, %v669, %v676
    %vm693 = vcmask 1041408
    %v694 = vsel %vm693, %v692, %v683
    %vm695 = vcmask 1042432
    %v696 = vsel %vm695, %v694, %v690
    %v697 = vld [vmem:[%s2] sm:$0xf]
    %v699 = vsel %vm153, %v697, 0
    %v702 = vsel %vm166, %v696, 0
    %704 = vmatprep.subr.mxu0 0.0
    %705 = vmatpush1.msra.mxu0 %v702
    %706 = vmatprep.subr.mxu0 0.0
    %707 = vmatpush1.msra.mxu0 0.0
    %708 = vmatprep.subr.mxu0 0.0
    %709 = vmatpush1.msra.mxu0 0.0
    %710 = vmatprep.subr.mxu0 0.0
    %711 = vmatpush1.msra.mxu0 0.0
    %712 = vmatprep.subr.mxu0 0.0
    %713 = vmatpush1.msra.mxu0 0.0
    %714 = vmatprep.subr.mxu0 0.0
    %715 = vmatpush1.msra.mxu0 0.0
    %716 = vmatprep.subr.mxu0 0.0
    %717 = vmatpush1.msra.mxu0 0.0
    %718 = vmatprep.subr.mxu0 0.0
    %719 = vmatpush1.msra.mxu0 0.0
    %720 = vmatprep.subr.mxu0 0.0
    %721 = vmatpush1.msra.mxu0 0.0
    %722 = vmatprep.subr.mxu0 0.0
    %723 = vmatpush1.msra.mxu0 0.0
    %724 = vmatprep.subr.mxu0 0.0
    %725 = vmatpush1.msra.mxu0 0.0
    %726 = vmatprep.subr.mxu0 0.0
    %727 = vmatpush1.msra.mxu0 0.0
    %728 = vmatprep.subr.mxu0 0.0
    %729 = vmatpush1.msra.mxu0 0.0
    %730 = vmatprep.subr.mxu0 0.0
    %731 = vmatpush1.msra.mxu0 0.0
    %732 = vmatprep.subr.mxu0 0.0
    %733 = vmatpush1.msra.mxu0 0.0
    %734 = vmatprep.subr.mxu0 0.0
    %735 = vmatpush1.msra.mxu0 0.0
    %736 = vmatprep.subr.mxu0 0.0
    %737 = vmatpush1.msra.mxu0 0.0
    %738 = vmatprep.subr.mxu0 0.0
    %739 = vmatpush1.msra.mxu0 0.0
    %740 = vmatprep.subr.mxu0 0.0
    %741 = vmatpush1.msra.mxu0 0.0
    %742 = vmatprep.subr.mxu0 0.0
    %743 = vmatpush1.msra.mxu0 0.0
    %744 = vmatprep.subr.mxu0 0.0
    %745 = vmatpush1.msra.mxu0 0.0
    %746 = vmatprep.subr.mxu0 0.0
    %747 = vmatpush1.msra.mxu0 0.0
    %748 = vmatprep.subr.mxu0 0.0
    %749 = vmatpush1.msra.mxu0 0.0
    %750 = vmatprep.subr.mxu0 0.0
    %751 = vmatpush1.msra.mxu0 0.0
    %752 = vmatprep.subr.mxu0 0.0
    %753 = vmatpush1.msra.mxu0 0.0
    %754 = vmatprep.subr.mxu0 0.0
    %755 = vmatpush1.msra.mxu0 0.0
    %756 = vmatprep.subr.mxu0 0.0
    %757 = vmatpush1.msra.mxu0 0.0
    %758 = vmatprep.subr.mxu0 0.0
    %759 = vmatpush1.msra.mxu0 0.0
    %760 = vmatprep.subr.mxu0 0.0
    %761 = vmatpush1.msra.mxu0 0.0
    %762 = vmatprep.subr.mxu0 0.0
    %763 = vmatpush1.msra.mxu0 0.0
    %764 = vmatprep.subr.mxu0 0.0
    %765 = vmatpush1.msra.mxu0 0.0
    %766 = vmatprep.subr.mxu0 0.0
    %767 = vmatpush1.msra.mxu0 0.0
    %768 = vmatprep.mubr.f32.mxu0 0.0
    %769 = vmatmul.mubr.f32.gmra.mrb[0].mxu0 %v699
    %v770 = vpop.f32.mrb[0].mxu0
    %v771 = vadd.f32 0.0, %v770
    %v772 = vpop.f32.mrb[0].mxu0
    %773 = vdwg.mxu0
    %v774 = vld [vmem:[%s9] sm:$0xff]
    %v775 = vld [vmem:[%s10] sm:$0x1]
    %v777 = vlaneseq
    %v778 = vshrl.u32 %v777, 7
    %v779 = vsub.s32 0, %v778
    %v780 = vrot.slane %v775, %v779
    %v783 = vsel %vm457, %v771, 0
    %785 = vmatprep.subr.mxu0 0.0
    %786 = vmatpush1.msra.mxu0 %v774
    %787 = vmatprep.subr.mxu0 0.0
    %788 = vmatpush1.msra.mxu0 0.0
    %789 = vmatprep.subr.mxu0 0.0
    %790 = vmatpush1.msra.mxu0 0.0
    %791 = vmatprep.subr.mxu0 0.0
    %792 = vmatpush1.msra.mxu0 0.0
    %793 = vmatprep.subr.mxu0 0.0
    %794 = vmatpush1.msra.mxu0 0.0
    %795 = vmatprep.subr.mxu0 0.0
    %796 = vmatpush1.msra.mxu0 0.0
    %797 = vmatprep.subr.mxu0 0.0
    %798 = vmatpush1.msra.mxu0 0.0
    %799 = vmatprep.subr.mxu0 0.0
    %800 = vmatpush1.msra.mxu0 0.0
    %801 = vmatprep.subr.mxu0 0.0
    %802 = vmatpush1.msra.mxu0 0.0
    %803 = vmatprep.subr.mxu0 0.0
    %804 = vmatpush1.msra.mxu0 0.0
    %805 = vmatprep.subr.mxu0 0.0
    %806 = vmatpush1.msra.mxu0 0.0
    %807 = vmatprep.subr.mxu0 0.0
    %808 = vmatpush1.msra.mxu0 0.0
    %809 = vmatprep.subr.mxu0 0.0
    %810 = vmatpush1.msra.mxu0 0.0
    %811 = vmatprep.subr.mxu0 0.0
    %812 = vmatpush1.msra.mxu0 0.0
    %813 = vmatprep.subr.mxu0 0.0
    %814 = vmatpush1.msra.mxu0 0.0
    %815 = vmatprep.subr.mxu0 0.0
    %816 = vmatpush1.msra.mxu0 0.0
    %817 = vmatprep.subr.mxu0 0.0
    %818 = vmatpush1.msra.mxu0 0.0
    %819 = vmatprep.subr.mxu0 0.0
    %820 = vmatpush1.msra.mxu0 0.0
    %821 = vmatprep.subr.mxu0 0.0
    %822 = vmatpush1.msra.mxu0 0.0
    %823 = vmatprep.subr.mxu0 0.0
    %824 = vmatpush1.msra.mxu0 0.0
    %825 = vmatprep.subr.mxu0 0.0
    %826 = vmatpush1.msra.mxu0 0.0
    %827 = vmatprep.subr.mxu0 0.0
    %828 = vmatpush1.msra.mxu0 0.0
    %829 = vmatprep.subr.mxu0 0.0
    %830 = vmatpush1.msra.mxu0 0.0
    %831 = vmatprep.subr.mxu0 0.0
    %832 = vmatpush1.msra.mxu0 0.0
    %833 = vmatprep.subr.mxu0 0.0
    %834 = vmatpush1.msra.mxu0 0.0
    %835 = vmatprep.subr.mxu0 0.0
    %836 = vmatpush1.msra.mxu0 0.0
    %837 = vmatprep.subr.mxu0 0.0
    %838 = vmatpush1.msra.mxu0 0.0
    %839 = vmatprep.subr.mxu0 0.0
    %840 = vmatpush1.msra.mxu0 0.0
    %841 = vmatprep.subr.mxu0 0.0
    %842 = vmatpush1.msra.mxu0 0.0
    %843 = vmatprep.subr.mxu0 0.0
    %844 = vmatpush1.msra.mxu0 0.0
    %845 = vmatprep.subr.mxu0 0.0
    %846 = vmatpush1.msra.mxu0 0.0
    %847 = vmatprep.subr.mxu0 0.0
    %848 = vmatpush1.msra.mxu0 0.0
    %849 = vmatprep.mubr.f32.mxu0 0.0
    %850 = vmatmul.mubr.f32.gmra.mrb[0].mxu0 %v783
    %v851 = vpop.f32.mrb[0].mxu0
    %v852 = vadd.f32 %v780, %v851
    %v853 = vpop.f32.mrb[0].mxu0
    %854 = vdwg.mxu0
    %v855 = vmax.f32 %v852, 0.0
    %v857 = vsel %vm166, %v855, 0
    %859 = vmatprep.subr.mxu0 0.0
    %860 = vmatpush1.msra.mxu0 %v857
    %861 = vmatprep.subr.mxu0 0.0
    %862 = vmatpush1.msra.mxu0 0.0
    %863 = vmatprep.subr.mxu0 0.0
    %864 = vmatpush1.msra.mxu0 0.0
    %865 = vmatprep.subr.mxu0 0.0
    %866 = vmatpush1.msra.mxu0 0.0
    %867 = vmatprep.subr.mxu0 0.0
    %868 = vmatpush1.msra.mxu0 0.0
    %869 = vmatprep.subr.mxu0 0.0
    %870 = vmatpush1.msra.mxu0 0.0
    %871 = vmatprep.subr.mxu0 0.0
    %872 = vmatpush1.msra.mxu0 0.0
    %873 = vmatprep.subr.mxu0 0.0
    %874 = vmatpush1.msra.mxu0 0.0
    %875 = vmatprep.subr.mxu0 0.0
    %876 = vmatpush1.msra.mxu0 0.0
    %877 = vmatprep.subr.mxu0 0.0
    %878 = vmatpush1.msra.mxu0 0.0
    %879 = vmatprep.subr.mxu0 0.0
    %880 = vmatpush1.msra.mxu0 0.0
    %881 = vmatprep.subr.mxu0 0.0
    %882 = vmatpush1.msra.mxu0 0.0
    %883 = vmatprep.subr.mxu0 0.0
    %884 = vmatpush1.msra.mxu0 0.0
    %885 = vmatprep.subr.mxu0 0.0
    %886 = vmatpush1.msra.mxu0 0.0
    %887 = vmatprep.subr.mxu0 0.0
    %888 = vmatpush1.msra.mxu0 0.0
    %889 = vmatprep.subr.mxu0 0.0
    %890 = vmatpush1.msra.mxu0 0.0
    %891 = vmatprep.subr.mxu0 0.0
    %892 = vmatpush1.msra.mxu0 0.0
    %893 = vmatprep.subr.mxu0 0.0
    %894 = vmatpush1.msra.mxu0 0.0
    %895 = vmatprep.subr.mxu0 0.0
    %896 = vmatpush1.msra.mxu0 0.0
    %897 = vmatprep.subr.mxu0 0.0
    %898 = vmatpush1.msra.mxu0 0.0
    %899 = vmatprep.subr.mxu0 0.0
    %900 = vmatpush1.msra.mxu0 0.0
    %901 = vmatprep.subr.mxu0 0.0
    %902 = vmatpush1.msra.mxu0 0.0
    %903 = vmatprep.subr.mxu0 0.0
    %904 = vmatpush1.msra.mxu0 0.0
    %905 = vmatprep.subr.mxu0 0.0
    %906 = vmatpush1.msra.mxu0 0.0
    %907 = vmatprep.subr.mxu0 0.0
    %908 = vmatpush1.msra.mxu0 0.0
    %909 = vmatprep.subr.mxu0 0.0
    %910 = vmatpush1.msra.mxu0 0.0
    %911 = vmatprep.subr.mxu0 0.0
    %912 = vmatpush1.msra.mxu0 0.0
    %913 = vmatprep.subr.mxu0 0.0
    %914 = vmatpush1.msra.mxu0 0.0
    %915 = vmatprep.subr.mxu0 0.0
    %916 = vmatpush1.msra.mxu0 0.0
    %917 = vmatprep.subr.mxu0 0.0
    %918 = vmatpush1.msra.mxu0 0.0
    %919 = vmatprep.subr.mxu0 0.0
    %920 = vmatpush1.msra.mxu0 0.0
    %921 = vmatprep.subr.mxu0 0.0
    %922 = vmatpush1.msra.mxu0 0.0
    %923 = vmatprep.mubr.f32.mxu0 0.0
    %924 = vmatmul.mubr.f32.gmra.mrb[0].mxu0 %v699
    %v925 = vpop.f32.mrb[0].mxu0
    %v926 = vadd.f32 0.0, %v925
    %v927 = vpop.f32.mrb[0].mxu0
    %928 = vdwg.mxu0
    %v929 = vld [vmem:[%s11] sm:$0xff]
    %v930 = vld [vmem:[%s11 + $0x8] sm:$0xff]
    %v931 = vld [vmem:[%s12] sm:$0x1]
    %v933 = vlaneseq
    %v934 = vshrl.u32 %v933, 7
    %v935 = vsub.s32 0, %v934
    %v936 = vrot.slane %v931, %v935
    %vm938 = vcmask 130048
    %v940 = vsel %vm938, %v926, 0
    %942 = vmatprep.subr.mxu0 0.0
    %943 = vmatpush1.msra.mxu0 %v929
    %944 = vmatprep.subr.mxu0 0.0
    %945 = vmatpush1.msra.mxu0 %v930
    %946 = vmatprep.subr.mxu0 0.0
    %947 = vmatpush1.msra.mxu0 0.0
    %948 = vmatprep.subr.mxu0 0.0
    %949 = vmatpush1.msra.mxu0 0.0
    %950 = vmatprep.subr.mxu0 0.0
    %951 = vmatpush1.msra.mxu0 0.0
    %952 = vmatprep.subr.mxu0 0.0
    %953 = vmatpush1.msra.mxu0 0.0
    %954 = vmatprep.subr.mxu0 0.0
    %955 = vmatpush1.msra.mxu0 0.0
    %956 = vmatprep.subr.mxu0 0.0
    %957 = vmatpush1.msra.mxu0 0.0
    %958 = vmatprep.subr.mxu0 0.0
    %959 = vmatpush1.msra.mxu0 0.0
    %960 = vmatprep.subr.mxu0 0.0
    %961 = vmatpush1.msra.mxu0 0.0
    %962 = vmatprep.subr.mxu0 0.0
    %963 = vmatpush1.msra.mxu0 0.0
    %964 = vmatprep.subr.mxu0 0.0
    %965 = vmatpush1.msra.mxu0 0.0
    %966 = vmatprep.subr.mxu0 0.0
    %967 = vmatpush1.msra.mxu0 0.0
    %968 = vmatprep.subr.mxu0 0.0
    %969 = vmatpush1.msra.mxu0 0.0
    %970 = vmatprep.subr.mxu0 0.0
    %971 = vmatpush1.msra.mxu0 0.0
    %972 = vmatprep.subr.mxu0 0.0
    %973 = vmatpush1.msra.mxu0 0.0
    %974 = vmatprep.subr.mxu0 0.0
    %975 = vmatpush1.msra.mxu0 0.0
    %976 = vmatprep.subr.mxu0 0.0
    %977 = vmatpush1.msra.mxu0 0.0
    %978 = vmatprep.subr.mxu0 0.0
    %979 = vmatpush1.msra.mxu0 0.0
    %980 = vmatprep.subr.mxu0 0.0
    %981 = vmatpush1.msra.mxu0 0.0
    %982 = vmatprep.subr.mxu0 0.0
    %983 = vmatpush1.msra.mxu0 0.0
    %984 = vmatprep.subr.mxu0 0.0
    %985 = vmatpush1.msra.mxu0 0.0
    %986 = vmatprep.subr.mxu0 0.0
    %987 = vmatpush1.msra.mxu0 0.0
    %988 = vmatprep.subr.mxu0 0.0
    %989 = vmatpush1.msra.mxu0 0.0
    %990 = vmatprep.subr.mxu0 0.0
    %991 = vmatpush1.msra.mxu0 0.0
    %992 = vmatprep.subr.mxu0 0.0
    %993 = vmatpush1.msra.mxu0 0.0
    %994 = vmatprep.subr.mxu0 0.0
    %995 = vmatpush1.msra.mxu0 0.0
    %996 = vmatprep.subr.mxu0 0.0
    %997 = vmatpush1.msra.mxu0 0.0
    %998 = vmatprep.subr.mxu0 0.0
    %999 = vmatpush1.msra.mxu0 0.0
    %1000 = vmatprep.subr.mxu0 0.0
    %1001 = vmatpush1.msra.mxu0 0.0
    %1002 = vmatprep.subr.mxu0 0.0
    %1003 = vmatpush1.msra.mxu0 0.0
    %1004 = vmatprep.subr.mxu0 0.0
    %1005 = vmatpush1.msra.mxu0 0.0
    %1006 = vmatprep.mubr.f32.mxu0 0.0
    %1007 = vmatmul.mubr.f32.gmra.mrb[0].mxu0 %v940
    %v1008 = vpop.f32.mrb[0].mxu0
    %v1009 = vadd.f32 %v936, %v1008
    %v1010 = vpop.f32.mrb[0].mxu0
    %1011 = vdwg.mxu0
    %vm1012 = vcmask 60416
    %1013 = vst.msk [vmem:[#allocation2] sm:$0xf] %vm1012, %v1009
    // Predicated region
    $region54: #{sage_kgcn_forward.1} parent=1 // pred_check
      _
    $region55: #{sage_kgcn_forward.1} parent=1 // pred_check_branch
      %1015 = sbr.rel (0) target = $region57
    $region56: #{sage_kgcn_forward.1} parent=1 // pred_region
      %s1017 = ssub.s32 64, 64
      %1018 = vsyncadd [#allocation3], %s1017
      %s1020 = sshll.u32 [#allocation2], 4
      %s1021 = int_to_ptr.vmem [resolvable:$true] %s1020
      %1023 = dma.vmem_to_hbm [thread:$0]  %s1021, 64, %s13, [#allocation3]
    $region57: #{sage_kgcn_forward.1} parent=1 // pred_fallthru
      _
    // Predicated region
    $region58: #{sage_kgcn_forward.1} parent=1 // pred_check
      _
    $region59: #{sage_kgcn_forward.1} parent=1 // pred_check_branch
      %1025 = sbr.rel (0) target = $region61
    $region60: #{sage_kgcn_forward.1} parent=1 // pred_region
      %1026 = dma.done [#allocation3], 64
    $region61: #{sage_kgcn_forward.1} parent=1 // pred_fallthru
      _
    %1027 = vsyncpa [#allocation3], 1

</llo_original>
